<compile_context>
chip_gen: v6e
topology: v6e:2x2x1
jax: 0.10.0
libtpu: 0.0.40
codegen_flags: <defaults>
</compile_context>

<pallas_src>
import jax
import jax.numpy as jnp
from jax.experimental import pallas as pl
from jax.experimental.pallas import tpu as pltpu


def _round_up(x, m):
    return ((x + m - 1) // m) * m


def _pad2(a, rows, cols, dtype):
    """Zero-pad a 2-D array up to (rows, cols) and cast to dtype."""
    a = jnp.asarray(a).reshape(a.shape[0], -1).astype(dtype)
    pr, pc = rows - a.shape[0], cols - a.shape[1]
    if pr == 0 and pc == 0:
        return a
    return jnp.pad(a, ((0, pr), (0, pc)))


def _vmem_cap_bytes():
    try:
        return int(pltpu.get_tpu_info().vmem_capacity_bytes)
    except Exception:
        return 64 << 20  # conservative (v7x per-TC VMEM)


def _pick_batch_tile(B, align, max_tile=2048, min_steps=1):
    """Pick a batch tile <= max_tile that minimizes batch padding."""
    steps = max(min_steps, -(-B // max_tile))
    return max(align, _round_up(-(-B // steps), align))


# ---------------------------------------------------------------------------
# Kernel: one batch tile through fc1->ReLU->fc2->ReLU->fc3
# ---------------------------------------------------------------------------
def pointnet_kernel(x_ref, w1_ref, b1_ref, w2_ref, b2_ref, w3_ref, b3_ref, o_ref):
    # fc1 + ReLU: matmul operands may be bf16; accumulate f32 on the MXU,
    # bias/ReLU in f32 on the VPU.
    h1 = jnp.dot(x_ref[...], w1_ref[...], preferred_element_type=jnp.float32)
    h1 = jnp.maximum(h1 + b1_ref[...], 0.0)
    # fc2 + ReLU
    h2 = jnp.dot(h1.astype(w2_ref.dtype), w2_ref[...],
                 preferred_element_type=jnp.float32)
    h2 = jnp.maximum(h2 + b2_ref[...], 0.0)
    # fc3 (no activation)
    out = jnp.dot(h2.astype(w3_ref.dtype), w3_ref[...],
                  preferred_element_type=jnp.float32) + b3_ref[...]
    o_ref[...] = out.astype(o_ref.dtype)


# ---------------------------------------------------------------------------
# One-time parameter preparation (pad hidden dims to 128, cast weights once)
# ---------------------------------------------------------------------------
def prepare_params(params, *, compute_dtype=jnp.bfloat16):
    """Pads/casts weights once so the per-call HLO contains no pad/cast ops.

    Layout: w1 (D_in, H1p), w2 (H1p, H2p), w3 (H2p, C).  K of w1 stays D_in
    (matches unpadded x); N of w3 stays C (true output width).  Biases stay
    f32 (VPU math stays f32, esp. on v5e).
    """
    w1, b1 = params["w1"], params["b1"]
    w2, b2 = params["w2"], params["b2"]
    w3, b3 = params["w3"], params["b3"]
    D_in, H1 = w1.shape
    H2, C = w2.shape[1], w3.shape[1]
    H1p, H2p = _round_up(H1, 128), _round_up(H2, 128)
    cdt = jnp.dtype(compute_dtype)
    return {
        "compute_dtype": cdt,
        "dims": (D_in, H1, H2, C, H1p, H2p),
        "w1": _pad2(w1, D_in, H1p, cdt),
        "b1": _pad2(b1, 1, H1p, jnp.float32),
        "w2": _pad2(w2, H1p, H2p, cdt),
        "b2": _pad2(b2, 1, H2p, jnp.float32),
        "w3": _pad2(w3, H2p, C, cdt),
        "b3": _pad2(b3, 1, C, jnp.float32),
    }


# ---------------------------------------------------------------------------
# Forward
# ---------------------------------------------------------------------------
def pointnet_forward(x, params, *, batch_tile=None, compute_dtype=jnp.bfloat16,
                     out_dtype=None, core_parallel=False):
    """x: (B, D_in).  params: raw dict (w1,b1,...) or prepare_params() output."""
    if "dims" not in params:
        params = prepare_params(params, compute_dtype=compute_dtype)
    cdt = params["compute_dtype"]
    D_in, H1, H2, C, H1p, H2p = params["dims"]

    B, Dx = x.shape
    assert Dx == D_in, f"x feature dim {Dx} != weight input dim {D_in}"
    out_dtype = x.dtype if out_dtype is None else out_dtype

    # ---- batch tile: packing-aligned, minimal padding -----------------------
    itemsize = jnp.dtype(cdt).itemsize
    align = {4: 8, 2: 16, 1: 32}.get(itemsize, 8)
    if batch_tile is None:
        tb = _pick_batch_tile(B, align, min_steps=2 if core_parallel else 1)
    else:
        tb = int(batch_tile)
    assert tb % align == 0, (
        f"batch_tile must be a multiple of {align} for {jnp.dtype(cdt).name}")
    Bp = _round_up(B, tb)
    grid = (Bp // tb,)

    # ---- x: cast only; pad batch rows only if the tile does not divide B ----
    xp = x.astype(cdt)
    if Bp != B:
        xp = jnp.pad(xp, ((0, Bp - B), (0, 0)))

    # ---- VMEM budget from the real footprint, capped by the actual chip ----
    ob = jnp.dtype(out_dtype).itemsize
    big_weights = max(H1p, H2p) >= 1024
    wbuf = 1 if big_weights else 2
    x_tile_bytes = tb * D_in * itemsize
    o_tile_bytes = tb * C * ob
    w_bytes = (D_in * H1p + H1p * H2p + H2p * C) * itemsize
    b_bytes = (H1p + H2p + C) * 4
    act_bytes = tb * (H1p + H2p) * (4 + itemsize)  # f32 intermediates + casts
    footprint = 2 * (x_tile_bytes + o_tile_bytes) + wbuf * (w_bytes + b_bytes) + act_bytes
    cap = _vmem_cap_bytes()
    vmem_limit = int(min(max(footprint + (8 << 20), 32 << 20), cap - (8 << 20)))

    rep2 = lambda i: (0, 0)  # weights/biases: same block every grid step

    def wspec(shape):
        # Constant-index-map weights never change block; for large hidden
        # sizes single-buffer them to free VMEM for bigger batch tiles.
        if big_weights:
            return pl.BlockSpec(shape, rep2, pipeline_mode=pl.Buffered(1))
        return pl.BlockSpec(shape, rep2)

    dim_sem = (pltpu.CORE_PARALLEL,) if core_parallel else ("parallel",)

    out_padded = pl.pallas_call(
        pointnet_kernel,
        out_shape=jax.ShapeDtypeStruct((Bp, C), out_dtype),
        grid_spec=pltpu.PrefetchScalarGridSpec(
            num_scalar_prefetch=0,
            grid=grid,
            in_specs=[
                pl.BlockSpec((tb, D_in), lambda i: (i, 0)),   # x tile (unpadded K)
                wspec((D_in, H1p)),                           # w1
                wspec((1, H1p)),                              # b1 (f32)
                wspec((H1p, H2p)),                            # w2
                wspec((1, H2p)),                              # b2 (f32)
                wspec((H2p, C)),                              # w3 (true N = C)
                wspec((1, C)),                                # b3 (f32)
            ],
            out_specs=pl.BlockSpec((tb, C), lambda i: (i, 0)),
        ),
        compiler_params=pltpu.CompilerParams(
            dimension_semantics=dim_sem,
            vmem_limit_bytes=vmem_limit),
    )(xp, params["w1"], params["b1"], params["w2"], params["b2"],
      params["w3"], params["b3"])

    if Bp != B:
        out_padded = out_padded[:B]
    return out_padded


# ---------------------------------------------------------------------------
# Reference + init helpers
# ---------------------------------------------------------------------------
def init_params(key, input_size, hidden1, hidden2, num_classes):
    """Deterministic init mimicking nn.Linear (uniform +/- 1/sqrt(fan_in))."""
    ks = jax.random.split(key, 6)

    def linear(kw, kb, fan_in, fan_out):
        bound = 1.0 / jnp.sqrt(fan_in)
        w = jax.random.uniform(kw, (fan_in, fan_out), jnp.float32, -bound, bound)
        b = jax.random.uniform(kb, (1, fan_out), jnp.float32, -bound, bound)
        return w, b

    w1, b1 = linear(ks[0], ks[1], input_size, hidden1)
    w2, b2 = linear(ks[2], ks[3], hidden1, hidden2)
    w3, b3 = linear(ks[4], ks[5], hidden2, num_classes)
    return {"w1": w1, "b1": b1, "w2": w2, "b2": b2, "w3": w3, "b3": b3}


def pointnet_ref(x, p):
    h1 = jnp.maximum(x @ p["w1"] + p["b1"], 0.0)
    h2 = jnp.maximum(h1 @ p["w2"] + p["b2"], 0.0)
    return h2 @ p["w3"] + p["b3"]


if __name__ == "__main__":
    key = jax.random.PRNGKey(0)
    k_x, k_p = jax.random.split(key)

    # Small shapes consistent with PointNet(input_size=16, h1=32, h2=32, num_classes=8)
    B, D_in, H1, H2, C = 64, 16, 32, 32, 8

    x = jax.random.normal(k_x, (B, D_in), jnp.float32)
    params = init_params(k_p, D_in, H1, H2, C)
    ref = pointnet_ref(x, params)

    # Default path: bf16 operands (f32 accumulation), one-time prepared weights.
    prepared_bf16 = prepare_params(params, compute_dtype=jnp.bfloat16)
    out_bf16 = jax.block_until_ready(pointnet_forward(x, prepared_bf16))
    assert out_bf16.shape == (B, C)
    assert jnp.allclose(out_bf16.astype(jnp.float32), ref, atol=5e-2, rtol=5e-2), \
        "bf16 mismatch vs reference"

    # f32-operand path with a small explicit tile -> multi-step pipelined grid.
    prepared_f32 = prepare_params(params, compute_dtype=jnp.float32)
    out_f32 = jax.block_until_ready(
        pointnet_forward(x, prepared_f32, batch_tile=16))
    assert out_f32.shape == (B, C)
    assert jnp.allclose(out_f32, ref, atol=1e-4, rtol=1e-4), "f32 mismatch vs reference"

    # TODO(synk): on v7x, call with core_parallel=True to shard the batch grid
    # across both TensorCores (kept off by default for single-TC v5e/v6e).

    print("KERNEL_OK")
</pallas_src>

<mosaic_0001>
module attributes {stable_mosaic.version = 11 : i64} {
  func.func @pointnet_kernel(%arg0: i32, %arg1: memref<64x16xbf16, #tpu.memory_space<vmem>>, %arg2: memref<16x128xbf16, #tpu.memory_space<vmem>>, %arg3: memref<1x128xf32, #tpu.memory_space<vmem>>, %arg4: memref<128x128xbf16, #tpu.memory_space<vmem>>, %arg5: memref<1x128xf32, #tpu.memory_space<vmem>>, %arg6: memref<128x8xbf16, #tpu.memory_space<vmem>>, %arg7: memref<1x8xf32, #tpu.memory_space<vmem>>, %arg8: memref<64x8xf32, #tpu.memory_space<vmem>>) attributes {dimension_semantics = [#tpu.dimension_semantics<parallel>], iteration_bounds = array<i64: 1>, scalar_prefetch = 0 : i64, scratch_operands = 0 : i64, tpu.core_type = #tpu.core_type<tc>, window_params = [{transform_indices = @transform_0, window_bounds = array<i64: 64, 16>}, {pipeline_mode = #tpu.pipeline_mode<synchronous>, transform_indices = @transform_1, window_bounds = array<i64: 16, 128>}, {pipeline_mode = #tpu.pipeline_mode<synchronous>, transform_indices = @transform_2, window_bounds = array<i64: 1, 128>}, {pipeline_mode = #tpu.pipeline_mode<synchronous>, transform_indices = @transform_3, window_bounds = array<i64: 128, 128>}, {pipeline_mode = #tpu.pipeline_mode<synchronous>, transform_indices = @transform_4, window_bounds = array<i64: 1, 128>}, {pipeline_mode = #tpu.pipeline_mode<synchronous>, transform_indices = @transform_5, window_bounds = array<i64: 128, 8>}, {pipeline_mode = #tpu.pipeline_mode<synchronous>, transform_indices = @transform_6, window_bounds = array<i64: 1, 8>}, {transform_indices = @transform_7, window_bounds = array<i64: 64, 8>}]} {
    %c0 = arith.constant 0 : index
    %c0_0 = arith.constant 0 : index
    %0 = vector.load %arg1[%c0, %c0_0] : memref<64x16xbf16, #tpu.memory_space<vmem>>, vector<64x16xbf16>
    %c0_1 = arith.constant 0 : index
    %c0_2 = arith.constant 0 : index
    %1 = vector.load %arg2[%c0_1, %c0_2] : memref<16x128xbf16, #tpu.memory_space<vmem>>, vector<16x128xbf16>
    %cst = arith.constant dense<0.000000e+00> : vector<64x128xf32>
    %2 = tpu.matmul %0, %1, %cst {dimension_numbers = #tpu.dot_dimension_numbers<[1], [0], [0], [1], [0, 0, 1, 1], [], []>} : vector<64x16xbf16>, vector<16x128xbf16>, vector<64x128xf32> -> vector<64x128xf32>
    %c0_3 = arith.constant 0 : index
    %c0_4 = arith.constant 0 : index
    %3 = vector.load %arg3[%c0_3, %c0_4] : memref<1x128xf32, #tpu.memory_space<vmem>>, vector<1x128xf32>
    %4 = vector.broadcast %3 : vector<1x128xf32> to vector<64x128xf32>
    %5 = arith.addf %2, %4 : vector<64x128xf32>
    %cst_5 = arith.constant 0.000000e+00 : f32
    %6 = vector.broadcast %cst_5 : f32 to vector<64x128xf32>
    %7 = arith.maximumf %5, %6 : vector<64x128xf32>
    %8 = arith.truncf %7 : vector<64x128xf32> to vector<64x128xbf16>
    %c0_6 = arith.constant 0 : index
    %c0_7 = arith.constant 0 : index
    %9 = vector.load %arg4[%c0_6, %c0_7] : memref<128x128xbf16, #tpu.memory_space<vmem>>, vector<128x128xbf16>
    %cst_8 = arith.constant dense<0.000000e+00> : vector<64x128xf32>
    %10 = tpu.matmul %8, %9, %cst_8 {dimension_numbers = #tpu.dot_dimension_numbers<[1], [0], [0], [1], [0, 0, 1, 1], [], []>} : vector<64x128xbf16>, vector<128x128xbf16>, vector<64x128xf32> -> vector<64x128xf32>
    %c0_9 = arith.constant 0 : index
    %c0_10 = arith.constant 0 : index
    %11 = vector.load %arg5[%c0_9, %c0_10] : memref<1x128xf32, #tpu.memory_space<vmem>>, vector<1x128xf32>
    %12 = vector.broadcast %11 : vector<1x128xf32> to vector<64x128xf32>
    %13 = arith.addf %10, %12 : vector<64x128xf32>
    %cst_11 = arith.constant 0.000000e+00 : f32
    %14 = vector.broadcast %cst_11 : f32 to vector<64x128xf32>
    %15 = arith.maximumf %13, %14 : vector<64x128xf32>
    %16 = arith.truncf %15 : vector<64x128xf32> to vector<64x128xbf16>
    %c0_12 = arith.constant 0 : index
    %c0_13 = arith.constant 0 : index
    %17 = vector.load %arg6[%c0_12, %c0_13] : memref<128x8xbf16, #tpu.memory_space<vmem>>, vector<128x8xbf16>
    %cst_14 = arith.constant dense<0.000000e+00> : vector<64x8xf32>
    %18 = tpu.matmul %16, %17, %cst_14 {dimension_numbers = #tpu.dot_dimension_numbers<[1], [0], [0], [1], [0, 0, 1, 1], [], []>} : vector<64x128xbf16>, vector<128x8xbf16>, vector<64x8xf32> -> vector<64x8xf32>
    %c0_15 = arith.constant 0 : index
    %c0_16 = arith.constant 0 : index
    %19 = vector.load %arg7[%c0_15, %c0_16] : memref<1x8xf32, #tpu.memory_space<vmem>>, vector<1x8xf32>
    %20 = vector.broadcast %19 : vector<1x8xf32> to vector<64x8xf32>
    %21 = arith.addf %18, %20 : vector<64x8xf32>
    %c0_17 = arith.constant 0 : index
    %c0_18 = arith.constant 0 : index
    %22 = vector.load %arg8[%c0_17, %c0_18] : memref<64x8xf32, #tpu.memory_space<vmem>>, vector<64x8xf32>
    tpu.vector_store %arg8[%c0_17, %c0_18], %21 {strides = array<i32>} : memref<64x8xf32, #tpu.memory_space<vmem>>, vector<64x8xf32>,
    return
  }
  func.func @transform_0(%arg0: i32) -> (i32, i32) {
    %c0_i32 = arith.constant 0 : i32
    %c0_i32_0 = arith.constant 0 : i32
    return %arg0, %c0_i32 : i32, i32
  }
  func.func @transform_1(%arg0: i32) -> (i32, i32) {
    %c0_i32 = arith.constant 0 : i32
    %c0_i32_0 = arith.constant 0 : i32
    %c0_i32_1 = arith.constant 0 : i32
    return %c0_i32, %c0_i32_0 : i32, i32
  }
  func.func @transform_2(%arg0: i32) -> (i32, i32) {
    %c0_i32 = arith.constant 0 : i32
    %c0_i32_0 = arith.constant 0 : i32
    %c0_i32_1 = arith.constant 0 : i32
    return %c0_i32, %c0_i32_0 : i32, i32
  }
  func.func @transform_3(%arg0: i32) -> (i32, i32) {
    %c0_i32 = arith.constant 0 : i32
    %c0_i32_0 = arith.constant 0 : i32
    %c0_i32_1 = arith.constant 0 : i32
    return %c0_i32, %c0_i32_0 : i32, i32
  }
  func.func @transform_4(%arg0: i32) -> (i32, i32) {
    %c0_i32 = arith.constant 0 : i32
    %c0_i32_0 = arith.constant 0 : i32
    %c0_i32_1 = arith.constant 0 : i32
    return %c0_i32, %c0_i32_0 : i32, i32
  }
  func.func @transform_5(%arg0: i32) -> (i32, i32) {
    %c0_i32 = arith.constant 0 : i32
    %c0_i32_0 = arith.constant 0 : i32
    %c0_i32_1 = arith.constant 0 : i32
    return %c0_i32, %c0_i32_0 : i32, i32
  }
  func.func @transform_6(%arg0: i32) -> (i32, i32) {
    %c0_i32 = arith.constant 0 : i32
    %c0_i32_0 = arith.constant 0 : i32
    %c0_i32_1 = arith.constant 0 : i32
    return %c0_i32, %c0_i32_0 : i32, i32
  }
  func.func @transform_7(%arg0: i32) -> (i32, i32) {
    %c0_i32 = arith.constant 0 : i32
    %c0_i32_0 = arith.constant 0 : i32
    return %arg0, %c0_i32 : i32, i32
  }
}

</mosaic_0001>

<llo_original>
// kernel: tpu_custom_call.1
$region0: #{tpu_custom_call.1}
  #allocation0 [shape = 'u32[]', space=smem, size = 0x4, offset = 0x4, fixed_abs, tag = 'smem constant byte address 0x4 - core index']
  #allocation1 [shape = 'u32[144,128]{1,0:T(1,128)}', space=vmem, size = 0x12000, scoped, tag = 'internal scratch']
  %s0 = inlined_call_operand.vmem [shape: bf16[64,16], index: 0, kind: input, shape index: {}]
  %s1 = inlined_call_operand.vmem [shape: bf16[16,128], index: 1, kind: input, shape index: {}]
  %s2 = inlined_call_operand.vmem [shape: f32[1,128], index: 2, kind: input, shape index: {}]
  %s3 = inlined_call_operand.vmem [shape: bf16[128,128], index: 3, kind: input, shape index: {}]
  %s4 = inlined_call_operand.vmem [shape: f32[1,128], index: 4, kind: input, shape index: {}]
  %s5 = inlined_call_operand.vmem [shape: bf16[128,8], index: 5, kind: input, shape index: {}]
  %s6 = inlined_call_operand.vmem [shape: f32[1,8], index: 6, kind: input, shape index: {}]
  %s7 = inlined_call_operand.vmem [shape: f32[64,8], index: 7, kind: output, shape index: {}]
  %s8 = sld [smem:[#allocation0]]
  $region38: #{tpu_custom_call.1} parent=0
    _
  %s10 = ssub.s32 1, %s8
  %s11 = scalar_select 0, %s10, %s8
  // Predicated region
  $region2: #{tpu_custom_call.1} parent=0 // pred_check
    _
  $region3: #{tpu_custom_call.1} parent=0 // pred_check_branch
    %13 = sbr.rel (0) target = $region5
  $region4: #{tpu_custom_call.1} parent=0 // pred_region
    _
  $region5: #{tpu_custom_call.1} parent=0 // pred_fallthru
    _
  // Predicated region
  $region6: #{tpu_custom_call.1} parent=0 // pred_check
    _
  $region7: #{tpu_custom_call.1} parent=0 // pred_check_branch
    %15 = sbr.rel (0) target = $region9
  $region8: #{tpu_custom_call.1} parent=0 // pred_region
    _
  $region9: #{tpu_custom_call.1} parent=0 // pred_fallthru
    _
  // Predicated region
  $region10: #{tpu_custom_call.1} parent=0 // pred_check
    _
  $region11: #{tpu_custom_call.1} parent=0 // pred_check_branch
    %17 = sbr.rel (0) target = $region13
  $region12: #{tpu_custom_call.1} parent=0 // pred_region
    _
  $region13: #{tpu_custom_call.1} parent=0 // pred_fallthru
    _
  // Predicated region
  $region14: #{tpu_custom_call.1} parent=0 // pred_check
    _
  $region15: #{tpu_custom_call.1} parent=0 // pred_check_branch
    %19 = sbr.rel (0) target = $region17
  $region16: #{tpu_custom_call.1} parent=0 // pred_region
    _
  $region17: #{tpu_custom_call.1} parent=0 // pred_fallthru
    _
  // Predicated region
  $region18: #{tpu_custom_call.1} parent=0 // pred_check
    _
  $region19: #{tpu_custom_call.1} parent=0 // pred_check_branch
    %21 = sbr.rel (0) target = $region21
  $region20: #{tpu_custom_call.1} parent=0 // pred_region
    _
  $region21: #{tpu_custom_call.1} parent=0 // pred_fallthru
    _
  // Predicated region
  $region22: #{tpu_custom_call.1} parent=0 // pred_check
    _
  $region23: #{tpu_custom_call.1} parent=0 // pred_check_branch
    %23 = sbr.rel (0) target = $region25
  $region24: #{tpu_custom_call.1} parent=0 // pred_region
    _
  $region25: #{tpu_custom_call.1} parent=0 // pred_fallthru
    _
  // Predicated region
  $region26: #{tpu_custom_call.1} parent=0 // pred_check
    _
  $region27: #{tpu_custom_call.1} parent=0 // pred_check_branch
    %25 = sbr.rel (0) target = $region29
  $region28: #{tpu_custom_call.1} parent=0 // pred_region
    _
  $region29: #{tpu_custom_call.1} parent=0 // pred_fallthru
    _
  %v27 = vld [vmem:[%s0] sm:$0xf]
  %v28 = vld [vmem:[%s0 + $0x4] sm:$0xf]
  %v29 = vld [vmem:[%s0 + $0x8] sm:$0xf]
  %v30 = vld [vmem:[%s0 + $0xc] sm:$0xf]
  %v31 = vld [vmem:[%s0 + $0x10] sm:$0xf]
  %v32 = vld [vmem:[%s0 + $0x14] sm:$0xf]
  %v33 = vld [vmem:[%s0 + $0x18] sm:$0xf]
  %v34 = vld [vmem:[%s0 + $0x1c] sm:$0xf]
  %v35 = vld [vmem:[%s1] sm:$0xf]
  %v36 = vld [vmem:[%s1 + $0x4] sm:$0xf]
  %v37 = vld [vmem:[%s2] sm:$0x1]
  %v39 = vlaneseq
  %v40 = vshrl.u32 %v39, 7
  %v41 = vsub.s32 0, %v40
  %v42 = vrot.slane %v37, %v41
  %v52 = vunpack.c.l.b16 %v27
  %v53 = vunpack.c.l.b16 %v28
  %v54 = vunpack.c.l.b16 %v29
  %v55 = vunpack.c.l.b16 %v30
  %v56 = vunpack.c.l.b16 %v31
  %v57 = vunpack.c.l.b16 %v32
  %v58 = vunpack.c.l.b16 %v33
  %v59 = vunpack.c.l.b16 %v34
  %v60 = vpack.c.b16 %v53, %v52
  %v61 = vpack.c.b16 %v55, %v54
  %v62 = vpack.c.b16 %v57, %v56
  %v63 = vpack.c.b16 %v59, %v58
  %v66 = vunpack.c.l.b16 %v35
  %v67 = vunpack.c.l.b16 %v36
  %v68 = vpack.c.b16 %v67, %v66
  %vm70 = vcmask 130048
  %v72 = vsel %vm70, %v60, 0
  %v75 = vsel %vm70, %v61, 0
  %v78 = vsel %vm70, %v62, 0
  %v81 = vsel %vm70, %v63, 0
  %83 = vmatprep.subr.bf16.mxu0 0
  %84 = vmatpush1.bf16.msra.mxu0 0
  %85 = vmatprep.subr.bf16.mxu0 0
  %86 = vmatpush1.bf16.msra.mxu0 0
  %87 = vmatprep.subr.bf16.mxu0 0
  %88 = vmatpush1.bf16.msra.mxu0 0
  %89 = vmatprep.subr.bf16.mxu0 0
  %90 = vmatpush1.bf16.msra.mxu0 0
  %91 = vmatprep.subr.bf16.mxu0 0
  %92 = vmatpush1.bf16.msra.mxu0 0
  %93 = vmatprep.subr.bf16.mxu0 0
  %94 = vmatpush1.bf16.msra.mxu0 0
  %95 = vmatprep.subr.bf16.mxu0 0
  %96 = vmatpush1.bf16.msra.mxu0 0
  %97 = vmatprep.subr.bf16.mxu0 0
  %98 = vmatpush1.bf16.msra.mxu0 %v68
  %99 = vmatprep.subr.bf16.mxu0 0
  %100 = vmatpush2.bf16.msra.mxu0 0
  %101 = vmatprep.subr.bf16.mxu0 0
  %102 = vmatpush2.bf16.msra.mxu0 0
  %103 = vmatprep.subr.bf16.mxu0 0
  %104 = vmatpush2.bf16.msra.mxu0 0
  %105 = vmatprep.subr.bf16.mxu0 0
  %106 = vmatpush2.bf16.msra.mxu0 0
  %107 = vmatprep.subr.bf16.mxu0 0
  %108 = vmatpush2.bf16.msra.mxu0 0
  %109 = vmatprep.subr.bf16.mxu0 0
  %110 = vmatpush2.bf16.msra.mxu0 0
  %111 = vmatprep.subr.bf16.mxu0 0
  %112 = vmatpush2.bf16.msra.mxu0 0
  %113 = vmatprep.subr.bf16.mxu0 0
  %114 = vmatpush2.bf16.msra.mxu0 0
  %115 = vmatprep.mubr.bf16.mxu0 0
  %116 = vmatmul.mubr.bf16.gmra.mxu0 %v72
  %v117 = vpop.f32.mrf.mxu0
  %v118 = vadd.f32 %v42, %v117
  %v119 = vpop.f32.mrf.mxu0
  %v120 = vpop.f32.mrf.mxu0
  %v121 = vadd.f32 %v42, %v120
  %v122 = vpop.f32.mrf.mxu0
  %123 = vmatprep.mubr.bf16.mxu0 0
  %124 = vmatmul.mubr.bf16.gmra.mxu0 %v75
  %v125 = vpop.f32.mrf.mxu0
  %v126 = vadd.f32 %v42, %v125
  %v127 = vpop.f32.mrf.mxu0
  %v128 = vpop.f32.mrf.mxu0
  %v129 = vadd.f32 %v42, %v128
  %v130 = vpop.f32.mrf.mxu0
  %131 = vmatprep.mubr.bf16.mxu0 0
  %132 = vmatmul.mubr.bf16.gmra.mxu0 %v78
  %v133 = vpop.f32.mrf.mxu0
  %v134 = vadd.f32 %v42, %v133
  %v135 = vpop.f32.mrf.mxu0
  %v136 = vpop.f32.mrf.mxu0
  %v137 = vadd.f32 %v42, %v136
  %v138 = vpop.f32.mrf.mxu0
  %139 = vmatprep.mubr.bf16.mxu0 0
  %140 = vmatmul.mubr.bf16.gmra.mxu0 %v81
  %v141 = vpop.f32.mrf.mxu0
  %v142 = vadd.f32 %v42, %v141
  %v143 = vpop.f32.mrf.mxu0
  %v144 = vpop.f32.mrf.mxu0
  %v145 = vadd.f32 %v42, %v144
  %v146 = vpop.f32.mrf.mxu0
  %147 = vdwg.mxu0
  %v148 = vmax.f32 %v118, 0.0
  %v149 = vmax.f32 %v121, 0.0
  %v150 = vmax.f32 %v126, 0.0
  %v151 = vmax.f32 %v129, 0.0
  %v152 = vmax.f32 %v134, 0.0
  %v153 = vmax.f32 %v137, 0.0
  %v154 = vmax.f32 %v142, 0.0
  %v155 = vmax.f32 %v145, 0.0
  %v156 = vpack.c.bf16 %v149, %v148
  %v157 = vpack.c.bf16 %v151, %v150
  %v158 = vpack.c.bf16 %v153, %v152
  %v159 = vpack.c.bf16 %v155, %v154
  %v160 = vld [vmem:[%s3] sm:$0xf]
  %v161 = vld [vmem:[%s3 + $0x4] sm:$0xf]
  %v162 = vld [vmem:[%s3 + $0x8] sm:$0xf]
  %v163 = vld [vmem:[%s3 + $0xc] sm:$0xf]
  %v164 = vld [vmem:[%s3 + $0x10] sm:$0xf]
  %v165 = vld [vmem:[%s3 + $0x14] sm:$0xf]
  %v166 = vld [vmem:[%s3 + $0x18] sm:$0xf]
  %v167 = vld [vmem:[%s3 + $0x1c] sm:$0xf]
  %v168 = vld [vmem:[%s3 + $0x20] sm:$0xf]
  %v169 = vld [vmem:[%s3 + $0x24] sm:$0xf]
  %v170 = vld [vmem:[%s3 + $0x28] sm:$0xf]
  %v171 = vld [vmem:[%s3 + $0x2c] sm:$0xf]
  %v172 = vld [vmem:[%s3 + $0x30] sm:$0xf]
  %v173 = vld [vmem:[%s3 + $0x34] sm:$0xf]
  %v174 = vld [vmem:[%s3 + $0x38] sm:$0xf]
  %v175 = vld [vmem:[%s3 + $0x3c] sm:$0xf]
  %v176 = vld [vmem:[%s4] sm:$0x1]
  %v178 = vlaneseq
  %v179 = vshrl.u32 %v178, 7
  %v180 = vsub.s32 0, %v179
  %v181 = vrot.slane %v176, %v180
  %v199 = vunpack.c.l.b16 %v160
  %v200 = vunpack.c.l.b16 %v161
  %v201 = vunpack.c.l.b16 %v162
  %v202 = vunpack.c.l.b16 %v163
  %v203 = vunpack.c.l.b16 %v164
  %v204 = vunpack.c.l.b16 %v165
  %v205 = vunpack.c.l.b16 %v166
  %v206 = vunpack.c.l.b16 %v167
  %v207 = vunpack.c.l.b16 %v168
  %v208 = vunpack.c.l.b16 %v169
  %v209 = vunpack.c.l.b16 %v170
  %v210 = vunpack.c.l.b16 %v171
  %v211 = vunpack.c.l.b16 %v172
  %v212 = vunpack.c.l.b16 %v173
  %v213 = vunpack.c.l.b16 %v174
  %v214 = vunpack.c.l.b16 %v175
  %v215 = vpack.c.b16 %v200, %v199
  %v216 = vpack.c.b16 %v202, %v201
  %v217 = vpack.c.b16 %v204, %v203
  %v218 = vpack.c.b16 %v206, %v205
  %v219 = vpack.c.b16 %v208, %v207
  %v220 = vpack.c.b16 %v210, %v209
  %v221 = vpack.c.b16 %v212, %v211
  %v222 = vpack.c.b16 %v214, %v213
  %231 = vmatprep.subr.bf16.mxu0 0
  %232 = vmatpush1.bf16.msra.mxu0 %v222
  %233 = vmatprep.subr.bf16.mxu0 0
  %234 = vmatpush1.bf16.msra.mxu0 %v221
  %235 = vmatprep.subr.bf16.mxu0 0
  %236 = vmatpush1.bf16.msra.mxu0 %v220
  %237 = vmatprep.subr.bf16.mxu0 0
  %238 = vmatpush1.bf16.msra.mxu0 %v219
  %239 = vmatprep.subr.bf16.mxu0 0
  %240 = vmatpush1.bf16.msra.mxu0 %v218
  %241 = vmatprep.subr.bf16.mxu0 0
  %242 = vmatpush1.bf16.msra.mxu0 %v217
  %243 = vmatprep.subr.bf16.mxu0 0
  %244 = vmatpush1.bf16.msra.mxu0 %v216
  %245 = vmatprep.subr.bf16.mxu0 0
  %246 = vmatpush1.bf16.msra.mxu0 %v215
  %247 = vmatprep.subr.bf16.mxu0 0
  %248 = vmatpush2.bf16.msra.mxu0 0
  %249 = vmatprep.subr.bf16.mxu0 0
  %250 = vmatpush2.bf16.msra.mxu0 0
  %251 = vmatprep.subr.bf16.mxu0 0
  %252 = vmatpush2.bf16.msra.mxu0 0
  %253 = vmatprep.subr.bf16.mxu0 0
  %254 = vmatpush2.bf16.msra.mxu0 0
  %255 = vmatprep.subr.bf16.mxu0 0
  %256 = vmatpush2.bf16.msra.mxu0 0
  %257 = vmatprep.subr.bf16.mxu0 0
  %258 = vmatpush2.bf16.msra.mxu0 0
  %259 = vmatprep.subr.bf16.mxu0 0
  %260 = vmatpush2.bf16.msra.mxu0 0
  %261 = vmatprep.subr.bf16.mxu0 0
  %262 = vmatpush2.bf16.msra.mxu0 0
  %263 = vmatprep.mubr.bf16.mxu0 0
  %264 = vmatmul.mubr.bf16.gmra.mxu0 %v156
  %v265 = vpop.f32.mrf.mxu0
  %v266 = vadd.f32 %v181, %v265
  %v267 = vpop.f32.mrf.mxu0
  %v268 = vpop.f32.mrf.mxu0
  %v269 = vadd.f32 %v181, %v268
  %v270 = vpop.f32.mrf.mxu0
  %271 = vmatprep.mubr.bf16.mxu0 0
  %272 = vmatmul.mubr.bf16.gmra.mxu0 %v157
  %v273 = vpop.f32.mrf.mxu0
  %v274 = vadd.f32 %v181, %v273
  %v275 = vpop.f32.mrf.mxu0
  %v276 = vpop.f32.mrf.mxu0
  %v277 = vadd.f32 %v181, %v276
  %v278 = vpop.f32.mrf.mxu0
  %279 = vmatprep.mubr.bf16.mxu0 0
  %280 = vmatmul.mubr.bf16.gmra.mxu0 %v158
  %v281 = vpop.f32.mrf.mxu0
  %v282 = vadd.f32 %v181, %v281
  %v283 = vpop.f32.mrf.mxu0
  %v284 = vpop.f32.mrf.mxu0
  %v285 = vadd.f32 %v181, %v284
  %v286 = vpop.f32.mrf.mxu0
  %287 = vmatprep.mubr.bf16.mxu0 0
  %288 = vmatmul.mubr.bf16.gmra.mxu0 %v159
  %v289 = vpop.f32.mrf.mxu0
  %v290 = vadd.f32 %v181, %v289
  %v291 = vpop.f32.mrf.mxu0
  %v292 = vpop.f32.mrf.mxu0
  %v293 = vadd.f32 %v181, %v292
  %v294 = vpop.f32.mrf.mxu0
  %295 = vdwg.mxu0
  %v296 = vmax.f32 %v266, 0.0
  %v297 = vmax.f32 %v269, 0.0
  %v298 = vmax.f32 %v274, 0.0
  %v299 = vmax.f32 %v277, 0.0
  %v300 = vmax.f32 %v282, 0.0
  %v301 = vmax.f32 %v285, 0.0
  %v302 = vmax.f32 %v290, 0.0
  %v303 = vmax.f32 %v293, 0.0
  %v304 = vpack.c.bf16 %v297, %v296
  %v305 = vpack.c.bf16 %v299, %v298
  %v306 = vpack.c.bf16 %v301, %v300
  %v307 = vpack.c.bf16 %v303, %v302
  %v308 = vld [vmem:[%s5] sm:$0xf]
  %v309 = vld [vmem:[%s5 + $0x4] sm:$0xf]
  %v310 = vld [vmem:[%s5 + $0x8] sm:$0xf]
  %v311 = vld [vmem:[%s5 + $0xc] sm:$0xf]
  %v312 = vld [vmem:[%s5 + $0x10] sm:$0xf]
  %v313 = vld [vmem:[%s5 + $0x14] sm:$0xf]
  %v314 = vld [vmem:[%s5 + $0x18] sm:$0xf]
  %v315 = vld [vmem:[%s5 + $0x1c] sm:$0xf]
  %v316 = vld [vmem:[%s5 + $0x20] sm:$0xf]
  %v317 = vld [vmem:[%s5 + $0x24] sm:$0xf]
  %v318 = vld [vmem:[%s5 + $0x28] sm:$0xf]
  %v319 = vld [vmem:[%s5 + $0x2c] sm:$0xf]
  %v320 = vld [vmem:[%s5 + $0x30] sm:$0xf]
  %v321 = vld [vmem:[%s5 + $0x34] sm:$0xf]
  %v322 = vld [vmem:[%s5 + $0x38] sm:$0xf]
  %v323 = vld [vmem:[%s5 + $0x3c] sm:$0xf]
  %v324 = vld [vmem:[%s6] sm:$0x1]
  %v326 = vlaneseq
  %v327 = vshrl.u32 %v326, 7
  %v328 = vsub.s32 0, %v327
  %v329 = vrot.slane %v324, %v328
  %v347 = vunpack.c.l.b16 %v308
  %v348 = vunpack.c.l.b16 %v309
  %v349 = vunpack.c.l.b16 %v310
  %v350 = vunpack.c.l.b16 %v311
  %v351 = vunpack.c.l.b16 %v312
  %v352 = vunpack.c.l.b16 %v313
  %v353 = vunpack.c.l.b16 %v314
  %v354 = vunpack.c.l.b16 %v315
  %v355 = vunpack.c.l.b16 %v316
  %v356 = vunpack.c.l.b16 %v317
  %v357 = vunpack.c.l.b16 %v318
  %v358 = vunpack.c.l.b16 %v319
  %v359 = vunpack.c.l.b16 %v320
  %v360 = vunpack.c.l.b16 %v321
  %v361 = vunpack.c.l.b16 %v322
  %v362 = vunpack.c.l.b16 %v323
  %v363 = vpack.c.b16 %v348, %v347
  %v364 = vpack.c.b16 %v350, %v349
  %v365 = vpack.c.b16 %v352, %v351
  %v366 = vpack.c.b16 %v354, %v353
  %v367 = vpack.c.b16 %v356, %v355
  %v368 = vpack.c.b16 %v358, %v357
  %v369 = vpack.c.b16 %v360, %v359
  %v370 = vpack.c.b16 %v362, %v361
  %379 = vmatprep.subr.bf16.mxu0 0
  %380 = vmatpush1.bf16.msra.mxu0 %v370
  %381 = vmatprep.subr.bf16.mxu0 0
  %382 = vmatpush1.bf16.msra.mxu0 %v369
  %383 = vmatprep.subr.bf16.mxu0 0
  %384 = vmatpush1.bf16.msra.mxu0 %v368
  %385 = vmatprep.subr.bf16.mxu0 0
  %386 = vmatpush1.bf16.msra.mxu0 %v367
  %387 = vmatprep.subr.bf16.mxu0 0
  %388 = vmatpush1.bf16.msra.mxu0 %v366
  %389 = vmatprep.subr.bf16.mxu0 0
  %390 = vmatpush1.bf16.msra.mxu0 %v365
  %391 = vmatprep.subr.bf16.mxu0 0
  %392 = vmatpush1.bf16.msra.mxu0 %v364
  %393 = vmatprep.subr.bf16.mxu0 0
  %394 = vmatpush1.bf16.msra.mxu0 %v363
  %395 = vmatprep.subr.bf16.mxu0 0
  %396 = vmatpush2.bf16.msra.mxu0 0
  %397 = vmatprep.subr.bf16.mxu0 0
  %398 = vmatpush2.bf16.msra.mxu0 0
  %399 = vmatprep.subr.bf16.mxu0 0
  %400 = vmatpush2.bf16.msra.mxu0 0
  %401 = vmatprep.subr.bf16.mxu0 0
  %402 = vmatpush2.bf16.msra.mxu0 0
  %403 = vmatprep.subr.bf16.mxu0 0
  %404 = vmatpush2.bf16.msra.mxu0 0
  %405 = vmatprep.subr.bf16.mxu0 0
  %406 = vmatpush2.bf16.msra.mxu0 0
  %407 = vmatprep.subr.bf16.mxu0 0
  %408 = vmatpush2.bf16.msra.mxu0 0
  %409 = vmatprep.subr.bf16.mxu0 0
  %410 = vmatpush2.bf16.msra.mxu0 0
  %411 = vmatprep.mubr.bf16.mxu0 0
  %412 = vmatmul.mubr.bf16.gmra.mxu0 %v304
  %v413 = vpop.f32.mrf.mxu0
  %v414 = vadd.f32 %v329, %v413
  %v415 = vpop.f32.mrf.mxu0
  %v416 = vpop.f32.mrf.mxu0
  %v417 = vadd.f32 %v329, %v416
  %v418 = vpop.f32.mrf.mxu0
  %419 = vmatprep.mubr.bf16.mxu0 0
  %420 = vmatmul.mubr.bf16.gmra.mxu0 %v305
  %v421 = vpop.f32.mrf.mxu0
  %v422 = vadd.f32 %v329, %v421
  %v423 = vpop.f32.mrf.mxu0
  %v424 = vpop.f32.mrf.mxu0
  %v425 = vadd.f32 %v329, %v424
  %v426 = vpop.f32.mrf.mxu0
  %427 = vmatprep.mubr.bf16.mxu0 0
  %428 = vmatmul.mubr.bf16.gmra.mxu0 %v306
  %v429 = vpop.f32.mrf.mxu0
  %v430 = vadd.f32 %v329, %v429
  %v431 = vpop.f32.mrf.mxu0
  %v432 = vpop.f32.mrf.mxu0
  %v433 = vadd.f32 %v329, %v432
  %v434 = vpop.f32.mrf.mxu0
  %435 = vmatprep.mubr.bf16.mxu0 0
  %436 = vmatmul.mubr.bf16.gmra.mxu0 %v307
  %v437 = vpop.f32.mrf.mxu0
  %v438 = vadd.f32 %v329, %v437
  %v439 = vpop.f32.mrf.mxu0
  %v440 = vpop.f32.mrf.mxu0
  %v441 = vadd.f32 %v329, %v440
  %v442 = vpop.f32.mrf.mxu0
  %443 = vdwg.mxu0
  %vm444 = vcmask 64512
  %445 = vst.msk [vmem:[%s7] sm:$0xff] %vm444, %v414
  %446 = vst.msk [vmem:[%s7 + $0x8] sm:$0xff] %vm444, %v417
  %447 = vst.msk [vmem:[%s7 + $0x10] sm:$0xff] %vm444, %v422
  %448 = vst.msk [vmem:[%s7 + $0x18] sm:$0xff] %vm444, %v425
  %449 = vst.msk [vmem:[%s7 + $0x20] sm:$0xff] %vm444, %v430
  %450 = vst.msk [vmem:[%s7 + $0x28] sm:$0xff] %vm444, %v433
  %451 = vst.msk [vmem:[%s7 + $0x30] sm:$0xff] %vm444, %v438
  %452 = vst.msk [vmem:[%s7 + $0x38] sm:$0xff] %vm444, %v441
  // Predicated region
  $region30: #{tpu_custom_call.1} parent=0 // pred_check
    _
  $region31: #{tpu_custom_call.1} parent=0 // pred_check_branch
    %454 = sbr.rel (0) target = $region33
  $region32: #{tpu_custom_call.1} parent=0 // pred_region
    _
  $region33: #{tpu_custom_call.1} parent=0 // pred_fallthru
    _
  // Predicated region
  $region34: #{tpu_custom_call.1} parent=0 // pred_check
    _
  $region35: #{tpu_custom_call.1} parent=0 // pred_check_branch
    %456 = sbr.rel (0) target = $region37
  $region36: #{tpu_custom_call.1} parent=0 // pred_region
    _
  $region37: #{tpu_custom_call.1} parent=0 // pred_fallthru
    _

</llo_original>
